<compile_context>
chip_gen: v7x
topology: tpu7x:2x2x1
jax: 0.10.0
libtpu: 0.0.40
codegen_flags: <defaults>
</compile_context>

<pallas_src>
import functools

import jax
import jax.numpy as jnp
from jax.experimental import pallas as pl
from jax.experimental.pallas import tpu as pltpu

_LANE = 128
_SUBLANE = 8


def _round_up(v, m):
    return ((v + m - 1) // m) * m


# --------------------------------------------------------------------------
# Fused kernel: x -> [Linear -> (+bias) -> ReLU] * (L-1) -> Linear -> out
# (BatchNorm is already folded into the weights/biases at prep time.)
# --------------------------------------------------------------------------
def _mlp_kernel(*refs, num_layers):
    x_ref, o_ref = refs[0], refs[-1]
    h = x_ref[...]
    for i in range(num_layers):
        w_ref = refs[1 + 2 * i]                       # [in_pad, out_pad]
        b_ref = refs[2 + 2 * i]                       # [1, out_pad] f32
        h = jnp.dot(h.astype(w_ref.dtype), w_ref[...],
                    preferred_element_type=jnp.float32) + b_ref[...]
        if i < num_layers - 1:
            # ReLU, then immediately narrow to the next layer's weight dtype
            # so the value carried between layers is half the bytes when the
            # next matmul runs in bf16 (less vreg pressure / spill traffic).
            h = jnp.maximum(h, 0.0).astype(refs[1 + 2 * (i + 1)].dtype)
    o_ref[...] = h.astype(o_ref.dtype)


# --------------------------------------------------------------------------
# Wrapper
# --------------------------------------------------------------------------
def mlp_forward(x, prepared, *, row_tile=512, out_dtype=jnp.float32):
    """Run the fused MLP.

    `prepared` = (list_of_W[in_pad, out_pad], list_of_b[1, out_pad] f32,
                  true_out_dim), as produced by `prepare_params`.
    """
    ws, bs, out_dim = prepared
    num_layers = len(ws)
    n, in_dim = x.shape
    in_pad = ws[0].shape[0]
    out_pad = ws[-1].shape[1]
    dims_pad = [w.shape[1] for w in ws]

    # ---- generation-aware VMEM budgeting ---------------------------------
    try:
        physical_vmem = int(pltpu.get_tpu_info().vmem_capacity_bytes)
    except Exception:                      # info query unavailable -> v7x-safe
        physical_vmem = 64 << 20
    budget = (physical_vmem * 3) // 4      # leave headroom for compiler scratch

    weight_bytes = sum(int(w.size) * w.dtype.itemsize for w in ws)
    bias_bytes = sum(int(b.size) * b.dtype.itemsize for b in bs)
    resident = weight_bytes + bias_bytes   # single-buffered (Buffered(1))
    # TODO(synk): if `resident` ever exceeds the VMEM budget (multi-thousand
    # hidden dims), a streamed variant (weights in HBM via memory_space=pl.ANY
    # + pltpu.emit_pipeline over K/N tiles) is needed; not required here.

    # Per-activation-row bytes: double-buffered x/out tiles + f32 headroom.
    per_row = 2 * (in_pad + out_pad) * 4 + 2 * max(dims_pad + [in_pad]) * 4
    max_tile_rows = max(_SUBLANE, (budget - resident) // max(per_row, 1))
    tile = int(min(row_tile, max_tile_rows))
    tile = max(_SUBLANE, (tile // _SUBLANE) * _SUBLANE)

    if n <= tile:
        tile = _round_up(max(n, 1), _SUBLANE)          # single block
    else:
        steps = pl.cdiv(n, tile)                       # >= 2 grid steps:
        tile = _round_up(pl.cdiv(n, steps), _SUBLANE)  # balanced, megacore-able

    n_pad = _round_up(n, tile)
    grid = (n_pad // tile,)

    x_padded = x
    if n_pad != n or in_pad != in_dim:
        x_padded = jnp.pad(x, ((0, n_pad - n), (0, in_pad - in_dim)))

    operands = [x_padded]
    in_specs = [pl.BlockSpec((tile, in_pad), lambda i: (i, 0))]
    for w, b in zip(ws, bs):
        operands += [w, b]
        # Grid-invariant blocks: single-buffer them (no benefit from the
        # default double-buffering; halves resident weight footprint).
        in_specs += [
            pl.BlockSpec(w.shape, lambda i: (0, 0), pipeline_mode=pl.Buffered(1)),
            pl.BlockSpec(b.shape, lambda i: (0, 0), pipeline_mode=pl.Buffered(1)),
        ]

    # Explicit scoped-VMEM limit with headroom (defaults are 16/32 MiB).
    needed = (resident
              + 2 * tile * (in_pad + out_pad) * 4
              + 2 * tile * max(dims_pad) * 4)
    vmem_limit = int(max(needed + (8 << 20), 16 << 20))
    vmem_limit = int(min(vmem_limit, physical_vmem - (2 << 20), 128 << 20))

    # Advisory cost estimate for the XLA scheduler.
    flops = 0
    prev = in_pad
    for d in dims_pad:
        flops += 2 * n_pad * prev * d
        prev = d
    bytes_accessed = (int(x_padded.size) * x_padded.dtype.itemsize
                      + n_pad * out_pad * jnp.dtype(out_dtype).itemsize
                      + weight_bytes + bias_bytes)
    cost = pl.CostEstimate(flops=int(flops), transcendentals=0,
                           bytes_accessed=int(bytes_accessed))

    out = pl.pallas_call(
        functools.partial(_mlp_kernel, num_layers=num_layers),
        out_shape=jax.ShapeDtypeStruct((n_pad, out_pad), out_dtype),
        grid=grid,
        in_specs=in_specs,
        out_specs=pl.BlockSpec((tile, out_pad), lambda i: (i, 0)),
        compiler_params=pltpu.CompilerParams(
            dimension_semantics=("parallel",),
            vmem_limit_bytes=vmem_limit),
        cost_estimate=cost,
    )(*operands)
    return out[:n, :out_dim]


# --------------------------------------------------------------------------
# Parameter construction (deterministic, mimics nn.Linear / nn.BatchNorm1d).
# Weights stored as [in, out] (transposed w.r.t. torch's [out, in]).
# --------------------------------------------------------------------------
def init_mlp_params(key, input_dim, hidden_dim, output_dim, num_layers=3):
    dims = [input_dim] + [hidden_dim] * (num_layers - 1) + [output_dim]
    params = {"lins": [], "bns": []}
    for i in range(num_layers):
        fan_in, fan_out = dims[i], dims[i + 1]
        key, kw, kb = jax.random.split(key, 3)
        bound = 1.0 / jnp.sqrt(fan_in)
        w = jax.random.uniform(kw, (fan_in, fan_out), jnp.float32, -bound, bound)
        b = jax.random.uniform(kb, (fan_out,), jnp.float32, -bound, bound)
        params["lins"].append((w, b))
    for i in range(num_layers - 1):
        key, kg, kbeta, km, kv = jax.random.split(key, 5)
        gamma = 1.0 + 0.1 * jax.random.normal(kg, (hidden_dim,), jnp.float32)
        beta = 0.1 * jax.random.normal(kbeta, (hidden_dim,), jnp.float32)
        running_mean = 0.1 * jax.random.normal(km, (hidden_dim,), jnp.float32)
        running_var = jnp.abs(1.0 + 0.1 * jax.random.normal(kv, (hidden_dim,),
                                                            jnp.float32))
        params["bns"].append((gamma, beta, running_mean, running_var))
    return params


def prepare_params(params, dataset="B", eps=1e-5, weight_dtype=jnp.bfloat16):
    """One-time host prep:
       * fold eval-mode BN (applied after ReLU) into the NEXT layer's W/b,
       * zero-pad every feature dim to a multiple of 128 (lane-dense I/O,
         full MXU tiles; padding contributes exact zeros),
       * cast un-folded weights to bf16, keep BN-folded weights f32,
       * biases -> [1, out_pad] f32.
    Returns (ws, bs, true_out_dim)."""
    # TODO(synk): training-mode BatchNorm (batch statistics) and stochastic
    # dropout (p=0.2) are not implemented; eval-mode semantics are used.
    lins, bns = params["lins"], params["bns"]
    num_layers = len(lins)
    out_dim = int(lins[-1][0].shape[1])
    ws, bs = [], []
    pending_scale = pending_shift = None
    for i in range(num_layers):
        w, b = lins[i]
        w = w.astype(jnp.float32)
        b = b.astype(jnp.float32)
        folded = pending_scale is not None
        if folded:
            # input to this layer was y*scale + shift  (y = relu output)
            b = b + pending_shift @ w          # uses the original (unscaled) W
            w = pending_scale[:, None] * w
        in_d, out_d = w.shape
        in_p, out_p = _round_up(in_d, _LANE), _round_up(out_d, _LANE)
        w = jnp.pad(w, ((0, in_p - in_d), (0, out_p - out_d)))
        b = jnp.pad(b, ((0, out_p - out_d),))
        # Keep folded weights in f32 so BN scale doesn't amplify bf16 error.
        ws.append(w.astype(jnp.float32 if folded else weight_dtype))
        bs.append(b.reshape(1, -1).astype(jnp.float32))
        if i < num_layers - 1 and dataset == "B":
            gamma, beta, mean, var = bns[i]
            scale = gamma / jnp.sqrt(var + eps)
            shift = beta - mean * scale
            pending_scale, pending_shift = scale, shift
        else:
            pending_scale = pending_shift = None
    return ws, bs, out_dim


# --------------------------------------------------------------------------
# Pure-JAX reference (unfused, f32) for correctness checking.
# --------------------------------------------------------------------------
def mlp_reference(x, params, dataset="B", eps=1e-5):
    num_layers = len(params["lins"])
    h = x
    for i in range(num_layers - 1):
        w, b = params["lins"][i]
        h = jnp.maximum(h @ w + b, 0.0)
        if dataset == "B":
            gamma, beta, mean, var = params["bns"][i]
            h = (h - mean) / jnp.sqrt(var + eps) * gamma + beta
            # eval-mode dropout == identity
    w, b = params["lins"][-1]
    return h @ w + b


if __name__ == "__main__":
    input_dim, hidden_dim, output_dim, num_layers = 16, 32, 8, 3
    batch = 8

    key = jax.random.PRNGKey(0)
    key, kx = jax.random.split(key)
    x = jax.random.normal(kx, (batch, input_dim), jnp.float32)
    params = init_mlp_params(key, input_dim, hidden_dim, output_dim, num_layers)

    prep_b = prepare_params(params, dataset="B")   # BN path, BN folded into W/b
    prep_a = prepare_params(params, dataset="A")   # plain ReLU-MLP path

    out_b = mlp_forward(x, prep_b)
    out_a = mlp_forward(x, prep_a)
    jax.block_until_ready((out_a, out_b))

    ref_b = mlp_reference(x, params, dataset="B")
    ref_a = mlp_reference(x, params, dataset="A")

    assert out_a.shape == (batch, output_dim)
    assert out_b.shape == (batch, output_dim)
    assert jnp.allclose(out_a, ref_a, rtol=3e-2, atol=3e-2)
    assert jnp.allclose(out_b, ref_b, rtol=3e-2, atol=3e-2)
    print("KERNEL_OK")
</pallas_src>

<mosaic_0001>
module attributes {stable_mosaic.version = 11 : i64} {
  func.func @_mlp_kernel(%arg0: i32, %arg1: memref<8x128xf32, #tpu.memory_space<vmem>>, %arg2: memref<128x128xbf16, #tpu.memory_space<vmem>>, %arg3: memref<1x128xf32, #tpu.memory_space<vmem>>, %arg4: memref<128x128xf32, #tpu.memory_space<vmem>>, %arg5: memref<1x128xf32, #tpu.memory_space<vmem>>, %arg6: memref<128x128xf32, #tpu.memory_space<vmem>>, %arg7: memref<1x128xf32, #tpu.memory_space<vmem>>, %arg8: memref<8x128xf32, #tpu.memory_space<vmem>>) attributes {dimension_semantics = [#tpu.dimension_semantics<parallel>], iteration_bounds = array<i64: 1>, scalar_prefetch = 0 : i64, scratch_operands = 0 : i64, tpu.core_type = #tpu.core_type<tc>, window_params = [{transform_indices = @transform_0, window_bounds = array<i64: 8, 128>}, {pipeline_mode = #tpu.pipeline_mode<synchronous>, transform_indices = @transform_1, window_bounds = array<i64: 128, 128>}, {pipeline_mode = #tpu.pipeline_mode<synchronous>, transform_indices = @transform_2, window_bounds = array<i64: 1, 128>}, {pipeline_mode = #tpu.pipeline_mode<synchronous>, transform_indices = @transform_3, window_bounds = array<i64: 128, 128>}, {pipeline_mode = #tpu.pipeline_mode<synchronous>, transform_indices = @transform_4, window_bounds = array<i64: 1, 128>}, {pipeline_mode = #tpu.pipeline_mode<synchronous>, transform_indices = @transform_5, window_bounds = array<i64: 128, 128>}, {pipeline_mode = #tpu.pipeline_mode<synchronous>, transform_indices = @transform_6, window_bounds = array<i64: 1, 128>}, {transform_indices = @transform_7, window_bounds = array<i64: 8, 128>}]} {
    %c0 = arith.constant 0 : index
    %c0_0 = arith.constant 0 : index
    %0 = vector.load %arg1[%c0, %c0_0] : memref<8x128xf32, #tpu.memory_space<vmem>>, vector<8x128xf32>
    %1 = arith.truncf %0 : vector<8x128xf32> to vector<8x128xbf16>
    %c0_1 = arith.constant 0 : index
    %c0_2 = arith.constant 0 : index
    %2 = vector.load %arg2[%c0_1, %c0_2] : memref<128x128xbf16, #tpu.memory_space<vmem>>, vector<128x128xbf16>
    %cst = arith.constant dense<0.000000e+00> : vector<8x128xf32>
    %3 = tpu.matmul %1, %2, %cst {dimension_numbers = #tpu.dot_dimension_numbers<[1], [0], [0], [1], [0, 0, 1, 1], [], []>} : vector<8x128xbf16>, vector<128x128xbf16>, vector<8x128xf32> -> vector<8x128xf32>
    %c0_3 = arith.constant 0 : index
    %c0_4 = arith.constant 0 : index
    %4 = vector.load %arg3[%c0_3, %c0_4] : memref<1x128xf32, #tpu.memory_space<vmem>>, vector<1x128xf32>
    %5 = vector.broadcast %4 : vector<1x128xf32> to vector<8x128xf32>
    %6 = arith.addf %3, %5 : vector<8x128xf32>
    %cst_5 = arith.constant 0.000000e+00 : f32
    %7 = vector.broadcast %cst_5 : f32 to vector<8x128xf32>
    %8 = arith.maximumf %6, %7 : vector<8x128xf32>
    %c0_6 = arith.constant 0 : index
    %c0_7 = arith.constant 0 : index
    %9 = vector.load %arg4[%c0_6, %c0_7] : memref<128x128xf32, #tpu.memory_space<vmem>>, vector<128x128xf32>
    %cst_8 = arith.constant dense<0.000000e+00> : vector<8x128xf32>
    %10 = tpu.matmul %8, %9, %cst_8 {dimension_numbers = #tpu.dot_dimension_numbers<[1], [0], [0], [1], [0, 0, 1, 1], [], []>} : vector<8x128xf32>, vector<128x128xf32>, vector<8x128xf32> -> vector<8x128xf32>
    %c0_9 = arith.constant 0 : index
    %c0_10 = arith.constant 0 : index
    %11 = vector.load %arg5[%c0_9, %c0_10] : memref<1x128xf32, #tpu.memory_space<vmem>>, vector<1x128xf32>
    %12 = vector.broadcast %11 : vector<1x128xf32> to vector<8x128xf32>
    %13 = arith.addf %10, %12 : vector<8x128xf32>
    %cst_11 = arith.constant 0.000000e+00 : f32
    %14 = vector.broadcast %cst_11 : f32 to vector<8x128xf32>
    %15 = arith.maximumf %13, %14 : vector<8x128xf32>
    %c0_12 = arith.constant 0 : index
    %c0_13 = arith.constant 0 : index
    %16 = vector.load %arg6[%c0_12, %c0_13] : memref<128x128xf32, #tpu.memory_space<vmem>>, vector<128x128xf32>
    %cst_14 = arith.constant dense<0.000000e+00> : vector<8x128xf32>
    %17 = tpu.matmul %15, %16, %cst_14 {dimension_numbers = #tpu.dot_dimension_numbers<[1], [0], [0], [1], [0, 0, 1, 1], [], []>} : vector<8x128xf32>, vector<128x128xf32>, vector<8x128xf32> -> vector<8x128xf32>
    %c0_15 = arith.constant 0 : index
    %c0_16 = arith.constant 0 : index
    %18 = vector.load %arg7[%c0_15, %c0_16] : memref<1x128xf32, #tpu.memory_space<vmem>>, vector<1x128xf32>
    %19 = vector.broadcast %18 : vector<1x128xf32> to vector<8x128xf32>
    %20 = arith.addf %17, %19 : vector<8x128xf32>
    %c0_17 = arith.constant 0 : index
    %c0_18 = arith.constant 0 : index
    %21 = vector.load %arg8[%c0_17, %c0_18] : memref<8x128xf32, #tpu.memory_space<vmem>>, vector<8x128xf32>
    tpu.vector_store %arg8[%c0_17, %c0_18], %20 {strides = array<i32>} : memref<8x128xf32, #tpu.memory_space<vmem>>, vector<8x128xf32>,
    return
  }
  func.func @transform_0(%arg0: i32) -> (i32, i32) {
    %c0_i32 = arith.constant 0 : i32
    %c0_i32_0 = arith.constant 0 : i32
    return %arg0, %c0_i32 : i32, i32
  }
  func.func @transform_1(%arg0: i32) -> (i32, i32) {
    %c0_i32 = arith.constant 0 : i32
    %c0_i32_0 = arith.constant 0 : i32
    %c0_i32_1 = arith.constant 0 : i32
    return %c0_i32, %c0_i32_0 : i32, i32
  }
  func.func @transform_2(%arg0: i32) -> (i32, i32) {
    %c0_i32 = arith.constant 0 : i32
    %c0_i32_0 = arith.constant 0 : i32
    %c0_i32_1 = arith.constant 0 : i32
    return %c0_i32, %c0_i32_0 : i32, i32
  }
  func.func @transform_3(%arg0: i32) -> (i32, i32) {
    %c0_i32 = arith.constant 0 : i32
    %c0_i32_0 = arith.constant 0 : i32
    %c0_i32_1 = arith.constant 0 : i32
    return %c0_i32, %c0_i32_0 : i32, i32
  }
  func.func @transform_4(%arg0: i32) -> (i32, i32) {
    %c0_i32 = arith.constant 0 : i32
    %c0_i32_0 = arith.constant 0 : i32
    %c0_i32_1 = arith.constant 0 : i32
    return %c0_i32, %c0_i32_0 : i32, i32
  }
  func.func @transform_5(%arg0: i32) -> (i32, i32) {
    %c0_i32 = arith.constant 0 : i32
    %c0_i32_0 = arith.constant 0 : i32
    %c0_i32_1 = arith.constant 0 : i32
    return %c0_i32, %c0_i32_0 : i32, i32
  }
  func.func @transform_6(%arg0: i32) -> (i32, i32) {
    %c0_i32 = arith.constant 0 : i32
    %c0_i32_0 = arith.constant 0 : i32
    %c0_i32_1 = arith.constant 0 : i32
    return %c0_i32, %c0_i32_0 : i32, i32
  }
  func.func @transform_7(%arg0: i32) -> (i32, i32) {
    %c0_i32 = arith.constant 0 : i32
    %c0_i32_0 = arith.constant 0 : i32
    return %arg0, %c0_i32 : i32, i32
  }
}

</mosaic_0001>

<llo_original>
// kernel: tpu_custom_call.1
$region0: #{tpu_custom_call.1}
  #allocation0 [shape = 'u32[]', space=smem, size = 0x4, offset = 0x4, fixed_abs, tag = 'smem constant byte address 0x4 - core index']
  #allocation1 [shape = 'u32[144,128]{1,0:T(1,128)}', space=vmem, size = 0x12000, scoped, tag = 'internal scratch']
  %s0 = inlined_call_operand.hbm [shape: f32[8,128], index: 0, kind: input, shape index: {}]
  %s1 = inlined_call_operand.hbm [shape: bf16[128,128], index: 1, kind: input, shape index: {}]
  %s2 = inlined_call_operand.vmem [shape: f32[1,128], index: 2, kind: input, shape index: {}]
  %s3 = inlined_call_operand.hbm [shape: f32[128,128], index: 3, kind: input, shape index: {}]
  %s4 = inlined_call_operand.vmem [shape: f32[1,128], index: 4, kind: input, shape index: {}]
  %s5 = inlined_call_operand.hbm [shape: f32[128,128], index: 5, kind: input, shape index: {}]
  %s6 = inlined_call_operand.vmem [shape: f32[1,128], index: 6, kind: input, shape index: {}]
  %s7 = inlined_call_operand.hbm [shape: f32[8,128], index: 7, kind: output, shape index: {}]
  %s8 = sld [smem:[#allocation0]]
  $region54: #{tpu_custom_call.1} parent=0
    _
  %s10 = ssub.s32 1, %s8
  %s11 = scalar_select 0, %s10, %s8
  $region1: #{tpu_custom_call.1} parent=0
    #allocation2 [shape = 'u8[4096]{0}', space=vmem, size = 0x1000, scoped, tag = 'input window, operand 0, single buffered']
    #allocation3 [shape = 's32[1]{0}', space=sflag, size = 0x4, scoped, tag = 'scoped memory for tpu_custom_call.1']
    #allocation4 [shape = 's32[1]{0}', space=sflag, size = 0x4, scoped, tag = 'scoped memory for tpu_custom_call.1']
    #allocation5 [shape = 'u8[32768]{0}', space=vmem, size = 0x8000, scoped, tag = 'input window, operand 1, single buffered']
    #allocation6 [shape = 's32[1]{0}', space=sflag, size = 0x4, scoped, tag = 'scoped memory for tpu_custom_call.1']
    #allocation7 [shape = 'u8[65536]{0}', space=vmem, size = 0x10000, scoped, tag = 'input window, operand 3, single buffered']
    #allocation8 [shape = 'u8[65536]{0}', space=vmem, size = 0x10000, scoped, tag = 'input window, operand 5, single buffered']
    #allocation9 [shape = 's32[1]{0}', space=sflag, size = 0x4, scoped, tag = 'scoped memory for tpu_custom_call.1']
    #allocation10 [shape = 'u8[4096]{0}', space=vmem, size = 0x1000, scoped, tag = 'output window, operand 0, single buffered']
    %12 = vsyncpa [#allocation3], 0
    %13 = vsyncpa [#allocation6], 0
    %14 = vsyncpa [#allocation9], 0
    %15 = vsyncpa [#allocation4], 0
    // Predicated region
    $region2: #{tpu_custom_call.1} parent=1 // pred_check
      _
    $region3: #{tpu_custom_call.1} parent=1 // pred_check_branch
      %17 = sbr.rel (0) target = $region5
    $region4: #{tpu_custom_call.1} parent=1 // pred_region
      %s19 = ssub.s32 128, 128
      %20 = vsyncadd [#allocation3], %s19
      %s22 = sshll.u32 [#allocation2], 4
      %s23 = int_to_ptr.vmem [resolvable:$true] %s22
      %25 = dma.hbm_to_vmem [thread:$0]  %s0, 128, %s23, [#allocation3]
    $region5: #{tpu_custom_call.1} parent=1 // pred_fallthru
      _
    // Predicated region
    $region6: #{tpu_custom_call.1} parent=1 // pred_check
      _
    $region7: #{tpu_custom_call.1} parent=1 // pred_check_branch
      %27 = sbr.rel (0) target = $region9
    $region8: #{tpu_custom_call.1} parent=1 // pred_region
      %s29 = ssub.s32 1024, 1024
      %30 = vsyncadd [#allocation6], %s29
      %s31 = sshll.u32 [#allocation5], 4
      %s32 = int_to_ptr.vmem [resolvable:$true] %s31
      %37 = dma.hbm_to_vmem [thread:$0]  %s1, 1024, %s32, [#allocation6], 64, 64, 4
    $region9: #{tpu_custom_call.1} parent=1 // pred_fallthru
      _
    // Predicated region
    $region10: #{tpu_custom_call.1} parent=1 // pred_check
      _
    $region11: #{tpu_custom_call.1} parent=1 // pred_check_branch
      %39 = sbr.rel (0) target = $region13
    $region12: #{tpu_custom_call.1} parent=1 // pred_region
      _
    $region13: #{tpu_custom_call.1} parent=1 // pred_fallthru
      _
    // Predicated region
    $region14: #{tpu_custom_call.1} parent=1 // pred_check
      _
    $region15: #{tpu_custom_call.1} parent=1 // pred_check_branch
      %41 = sbr.rel (0) target = $region17
    $region16: #{tpu_custom_call.1} parent=1 // pred_region
      %s43 = ssub.s32 2048, 2048
      %44 = vsyncadd [#allocation6], %s43
      %s45 = sshll.u32 [#allocation7], 4
      %s46 = int_to_ptr.vmem [resolvable:$true] %s45
      %51 = dma.hbm_to_vmem [thread:$0]  %s3, 2048, %s46, [#allocation6], 128, 128, 8
    $region17: #{tpu_custom_call.1} parent=1 // pred_fallthru
      _
    // Predicated region
    $region18: #{tpu_custom_call.1} parent=1 // pred_check
      _
    $region19: #{tpu_custom_call.1} parent=1 // pred_check_branch
      %53 = sbr.rel (0) target = $region21
    $region20: #{tpu_custom_call.1} parent=1 // pred_region
      _
    $region21: #{tpu_custom_call.1} parent=1 // pred_fallthru
      _
    // Predicated region
    $region22: #{tpu_custom_call.1} parent=1 // pred_check
      _
    $region23: #{tpu_custom_call.1} parent=1 // pred_check_branch
      %55 = sbr.rel (0) target = $region25
    $region24: #{tpu_custom_call.1} parent=1 // pred_region
      %s57 = ssub.s32 2048, 2048
      %58 = vsyncadd [#allocation9], %s57
      %s59 = sshll.u32 [#allocation8], 4
      %s60 = int_to_ptr.vmem [resolvable:$true] %s59
      %65 = dma.hbm_to_vmem [thread:$0]  %s5, 2048, %s60, [#allocation9], 128, 128, 8
    $region25: #{tpu_custom_call.1} parent=1 // pred_fallthru
      _
    // Predicated region
    $region26: #{tpu_custom_call.1} parent=1 // pred_check
      _
    $region27: #{tpu_custom_call.1} parent=1 // pred_check_branch
      %67 = sbr.rel (0) target = $region29
    $region28: #{tpu_custom_call.1} parent=1 // pred_region
      _
    $region29: #{tpu_custom_call.1} parent=1 // pred_fallthru
      _
    // Predicated region
    $region30: #{tpu_custom_call.1} parent=1 // pred_check
      _
    $region31: #{tpu_custom_call.1} parent=1 // pred_check_branch
      %69 = sbr.rel (0) target = $region33
    $region32: #{tpu_custom_call.1} parent=1 // pred_region
      %70 = dma.done [#allocation3], 128
    $region33: #{tpu_custom_call.1} parent=1 // pred_fallthru
      _
    // Predicated region
    $region34: #{tpu_custom_call.1} parent=1 // pred_check
      _
    $region35: #{tpu_custom_call.1} parent=1 // pred_check_branch
      %72 = sbr.rel (0) target = $region37
    $region36: #{tpu_custom_call.1} parent=1 // pred_region
      %73 = dma.done [#allocation6], 1024
    $region37: #{tpu_custom_call.1} parent=1 // pred_fallthru
      _
    // Predicated region
    $region38: #{tpu_custom_call.1} parent=1 // pred_check
      _
    $region39: #{tpu_custom_call.1} parent=1 // pred_check_branch
      %75 = sbr.rel (0) target = $region41
    $region40: #{tpu_custom_call.1} parent=1 // pred_region
      %76 = dma.done [#allocation6], 2048
    $region41: #{tpu_custom_call.1} parent=1 // pred_fallthru
      _
    // Predicated region
    $region42: #{tpu_custom_call.1} parent=1 // pred_check
      _
    $region43: #{tpu_custom_call.1} parent=1 // pred_check_branch
      %78 = sbr.rel (0) target = $region45
    $region44: #{tpu_custom_call.1} parent=1 // pred_region
      %79 = dma.done [#allocation9], 2048
    $region45: #{tpu_custom_call.1} parent=1 // pred_fallthru
      _
    %v81 = vld [vmem:[#allocation2] sm:$0xff]
    %v82 = vpack.c.bf16 %v81, %v81
    %v83 = vld [vmem:[#allocation5] sm:$0xf]
    %v84 = vld [vmem:[#allocation5 + $0x4] sm:$0xf]
    %v85 = vld [vmem:[#allocation5 + $0x8] sm:$0xf]
    %v86 = vld [vmem:[#allocation5 + $0xc] sm:$0xf]
    %v87 = vld [vmem:[#allocation5 + $0x10] sm:$0xf]
    %v88 = vld [vmem:[#allocation5 + $0x14] sm:$0xf]
    %v89 = vld [vmem:[#allocation5 + $0x18] sm:$0xf]
    %v90 = vld [vmem:[#allocation5 + $0x1c] sm:$0xf]
    %v91 = vld [vmem:[#allocation5 + $0x20] sm:$0xf]
    %v92 = vld [vmem:[#allocation5 + $0x24] sm:$0xf]
    %v93 = vld [vmem:[#allocation5 + $0x28] sm:$0xf]
    %v94 = vld [vmem:[#allocation5 + $0x2c] sm:$0xf]
    %v95 = vld [vmem:[#allocation5 + $0x30] sm:$0xf]
    %v96 = vld [vmem:[#allocation5 + $0x34] sm:$0xf]
    %v97 = vld [vmem:[#allocation5 + $0x38] sm:$0xf]
    %v98 = vld [vmem:[#allocation5 + $0x3c] sm:$0xf]
    %v99 = vld [vmem:[%s2] sm:$0x1]
    %v101 = vlaneseq
    %v102 = vshrl.u32 %v101, 7
    %v103 = vsub.s32 0, %v102
    %v104 = vrot.slane %v99, %v103
    %v122 = vunpack.c.l.b16 %v83
    %v123 = vunpack.c.l.b16 %v84
    %v124 = vunpack.c.l.b16 %v85
    %v125 = vunpack.c.l.b16 %v86
    %v126 = vunpack.c.l.b16 %v87
    %v127 = vunpack.c.l.b16 %v88
    %v128 = vunpack.c.l.b16 %v89
    %v129 = vunpack.c.l.b16 %v90
    %v130 = vunpack.c.l.b16 %v91
    %v131 = vunpack.c.l.b16 %v92
    %v132 = vunpack.c.l.b16 %v93
    %v133 = vunpack.c.l.b16 %v94
    %v134 = vunpack.c.l.b16 %v95
    %v135 = vunpack.c.l.b16 %v96
    %v136 = vunpack.c.l.b16 %v97
    %v137 = vunpack.c.l.b16 %v98
    %v138 = vpack.c.b16 %v123, %v122
    %v139 = vpack.c.b16 %v125, %v124
    %v140 = vpack.c.b16 %v127, %v126
    %v141 = vpack.c.b16 %v129, %v128
    %v142 = vpack.c.b16 %v131, %v130
    %v143 = vpack.c.b16 %v133, %v132
    %v144 = vpack.c.b16 %v135, %v134
    %v145 = vpack.c.b16 %v137, %v136
    %154 = vmatprep.subr.bf16.mxu0 0
    %155 = vmatpush1.bf16.msra.mxu0 %v138
    %156 = vmatprep.subr.bf16.mxu0 0
    %157 = vmatpush1.bf16.msra.mxu0 %v139
    %158 = vmatprep.subr.bf16.mxu0 0
    %159 = vmatpush1.bf16.msra.mxu0 %v140
    %160 = vmatprep.subr.bf16.mxu0 0
    %161 = vmatpush1.bf16.msra.mxu0 %v141
    %162 = vmatprep.subr.bf16.mxu0 0
    %163 = vmatpush1.bf16.msra.mxu0 %v142
    %164 = vmatprep.subr.bf16.mxu0 0
    %165 = vmatpush1.bf16.msra.mxu0 %v143
    %166 = vmatprep.subr.bf16.mxu0 0
    %167 = vmatpush1.bf16.msra.mxu0 %v144
    %168 = vmatprep.subr.bf16.mxu0 0
    %169 = vmatpush1.bf16.msra.mxu0 %v145
    %170 = vmatprep.subr.bf16.mxu0 0
    %171 = vmatpush1.bf16.msra.mxu0 0
    %172 = vmatprep.subr.bf16.mxu0 0
    %173 = vmatpush1.bf16.msra.mxu0 0
    %174 = vmatprep.subr.bf16.mxu0 0
    %175 = vmatpush1.bf16.msra.mxu0 0
    %176 = vmatprep.subr.bf16.mxu0 0
    %177 = vmatpush1.bf16.msra.mxu0 0
    %178 = vmatprep.subr.bf16.mxu0 0
    %179 = vmatpush1.bf16.msra.mxu0 0
    %180 = vmatprep.subr.bf16.mxu0 0
    %181 = vmatpush1.bf16.msra.mxu0 0
    %182 = vmatprep.subr.bf16.mxu0 0
    %183 = vmatpush1.bf16.msra.mxu0 0
    %184 = vmatprep.subr.bf16.mxu0 0
    %185 = vmatpush1.bf16.msra.mxu0 0
    %186 = vmatprep.mubr.bf16.mxu0 0
    %187 = vmatmul.mubr.bf16.gmra.mrb[0].mxu0 %v82
    %v188 = vpop.f32.mrb[0].mxu0
    %v189 = vadd.f32 %v104, %v188
    %v190 = vpop.f32.mrb[0].mxu0
    %v191 = vpop.f32.mrb[0].mxu0
    %v192 = vpop.f32.mrb[0].mxu0
    %193 = vdwg.mxu0
    %v194 = vmax.f32 %v189, 0.0
    %v195 = vld [vmem:[#allocation7] sm:$0xff]
    %v196 = vld [vmem:[#allocation7 + $0x8] sm:$0xff]
    %v197 = vld [vmem:[#allocation7 + $0x10] sm:$0xff]
    %v198 = vld [vmem:[#allocation7 + $0x18] sm:$0xff]
    %v199 = vld [vmem:[#allocation7 + $0x20] sm:$0xff]
    %v200 = vld [vmem:[#allocation7 + $0x28] sm:$0xff]
    %v201 = vld [vmem:[#allocation7 + $0x30] sm:$0xff]
    %v202 = vld [vmem:[#allocation7 + $0x38] sm:$0xff]
    %v203 = vld [vmem:[#allocation7 + $0x40] sm:$0xff]
    %v204 = vld [vmem:[#allocation7 + $0x48] sm:$0xff]
    %v205 = vld [vmem:[#allocation7 + $0x50] sm:$0xff]
    %v206 = vld [vmem:[#allocation7 + $0x58] sm:$0xff]
    %v207 = vld [vmem:[#allocation7 + $0x60] sm:$0xff]
    %v208 = vld [vmem:[#allocation7 + $0x68] sm:$0xff]
    %v209 = vld [vmem:[#allocation7 + $0x70] sm:$0xff]
    %v210 = vld [vmem:[#allocation7 + $0x78] sm:$0xff]
    %v211 = vld [vmem:[%s4] sm:$0x1]
    %v213 = vlaneseq
    %v214 = vshrl.u32 %v213, 7
    %v215 = vsub.s32 0, %v214
    %v216 = vrot.slane %v211, %v215
    %218 = vmatprep.subr.mxu0 0.0
    %219 = vmatpush1.msra.mxu0 %v195
    %220 = vmatprep.subr.mxu0 0.0
    %221 = vmatpush1.msra.mxu0 %v196
    %222 = vmatprep.subr.mxu0 0.0
    %223 = vmatpush1.msra.mxu0 %v197
    %224 = vmatprep.subr.mxu0 0.0
    %225 = vmatpush1.msra.mxu0 %v198
    %226 = vmatprep.subr.mxu0 0.0
    %227 = vmatpush1.msra.mxu0 %v199
    %228 = vmatprep.subr.mxu0 0.0
    %229 = vmatpush1.msra.mxu0 %v200
    %230 = vmatprep.subr.mxu0 0.0
    %231 = vmatpush1.msra.mxu0 %v201
    %232 = vmatprep.subr.mxu0 0.0
    %233 = vmatpush1.msra.mxu0 %v202
    %234 = vmatprep.subr.mxu0 0.0
    %235 = vmatpush1.msra.mxu0 %v203
    %236 = vmatprep.subr.mxu0 0.0
    %237 = vmatpush1.msra.mxu0 %v204
    %238 = vmatprep.subr.mxu0 0.0
    %239 = vmatpush1.msra.mxu0 %v205
    %240 = vmatprep.subr.mxu0 0.0
    %241 = vmatpush1.msra.mxu0 %v206
    %242 = vmatprep.subr.mxu0 0.0
    %243 = vmatpush1.msra.mxu0 %v207
    %244 = vmatprep.subr.mxu0 0.0
    %245 = vmatpush1.msra.mxu0 %v208
    %246 = vmatprep.subr.mxu0 0.0
    %247 = vmatpush1.msra.mxu0 %v209
    %248 = vmatprep.subr.mxu0 0.0
    %249 = vmatpush1.msra.mxu0 %v210
    %250 = vmatprep.subr.mxu0 0.0
    %251 = vmatpush1.msra.mxu0 0.0
    %252 = vmatprep.subr.mxu0 0.0
    %253 = vmatpush1.msra.mxu0 0.0
    %254 = vmatprep.subr.mxu0 0.0
    %255 = vmatpush1.msra.mxu0 0.0
    %256 = vmatprep.subr.mxu0 0.0
    %257 = vmatpush1.msra.mxu0 0.0
    %258 = vmatprep.subr.mxu0 0.0
    %259 = vmatpush1.msra.mxu0 0.0
    %260 = vmatprep.subr.mxu0 0.0
    %261 = vmatpush1.msra.mxu0 0.0
    %262 = vmatprep.subr.mxu0 0.0
    %263 = vmatpush1.msra.mxu0 0.0
    %264 = vmatprep.subr.mxu0 0.0
    %265 = vmatpush1.msra.mxu0 0.0
    %266 = vmatprep.subr.mxu0 0.0
    %267 = vmatpush1.msra.mxu0 0.0
    %268 = vmatprep.subr.mxu0 0.0
    %269 = vmatpush1.msra.mxu0 0.0
    %270 = vmatprep.subr.mxu0 0.0
    %271 = vmatpush1.msra.mxu0 0.0
    %272 = vmatprep.subr.mxu0 0.0
    %273 = vmatpush1.msra.mxu0 0.0
    %274 = vmatprep.subr.mxu0 0.0
    %275 = vmatpush1.msra.mxu0 0.0
    %276 = vmatprep.subr.mxu0 0.0
    %277 = vmatpush1.msra.mxu0 0.0
    %278 = vmatprep.subr.mxu0 0.0
    %279 = vmatpush1.msra.mxu0 0.0
    %280 = vmatprep.subr.mxu0 0.0
    %281 = vmatpush1.msra.mxu0 0.0
    %282 = vmatprep.mubr.f32.mxu0 0.0
    %283 = vmatmul.mubr.f32.gmra.mrb[0].mxu0 %v194
    %v284 = vpop.f32.mrb[0].mxu0
    %v285 = vadd.f32 %v216, %v284
    %v286 = vpop.f32.mrb[0].mxu0
    %287 = vdwg.mxu0
    %v288 = vmax.f32 %v285, 0.0
    %v289 = vld [vmem:[#allocation8] sm:$0xff]
    %v290 = vld [vmem:[#allocation8 + $0x8] sm:$0xff]
    %v291 = vld [vmem:[#allocation8 + $0x10] sm:$0xff]
    %v292 = vld [vmem:[#allocation8 + $0x18] sm:$0xff]
    %v293 = vld [vmem:[#allocation8 + $0x20] sm:$0xff]
    %v294 = vld [vmem:[#allocation8 + $0x28] sm:$0xff]
    %v295 = vld [vmem:[#allocation8 + $0x30] sm:$0xff]
    %v296 = vld [vmem:[#allocation8 + $0x38] sm:$0xff]
    %v297 = vld [vmem:[#allocation8 + $0x40] sm:$0xff]
    %v298 = vld [vmem:[#allocation8 + $0x48] sm:$0xff]
    %v299 = vld [vmem:[#allocation8 + $0x50] sm:$0xff]
    %v300 = vld [vmem:[#allocation8 + $0x58] sm:$0xff]
    %v301 = vld [vmem:[#allocation8 + $0x60] sm:$0xff]
    %v302 = vld [vmem:[#allocation8 + $0x68] sm:$0xff]
    %v303 = vld [vmem:[#allocation8 + $0x70] sm:$0xff]
    %v304 = vld [vmem:[#allocation8 + $0x78] sm:$0xff]
    %v305 = vld [vmem:[%s6] sm:$0x1]
    %v307 = vlaneseq
    %v308 = vshrl.u32 %v307, 7
    %v309 = vsub.s32 0, %v308
    %v310 = vrot.slane %v305, %v309
    %312 = vmatprep.subr.mxu0 0.0
    %313 = vmatpush1.msra.mxu0 %v289
    %314 = vmatprep.subr.mxu0 0.0
    %315 = vmatpush1.msra.mxu0 %v290
    %316 = vmatprep.subr.mxu0 0.0
    %317 = vmatpush1.msra.mxu0 %v291
    %318 = vmatprep.subr.mxu0 0.0
    %319 = vmatpush1.msra.mxu0 %v292
    %320 = vmatprep.subr.mxu0 0.0
    %321 = vmatpush1.msra.mxu0 %v293
    %322 = vmatprep.subr.mxu0 0.0
    %323 = vmatpush1.msra.mxu0 %v294
    %324 = vmatprep.subr.mxu0 0.0
    %325 = vmatpush1.msra.mxu0 %v295
    %326 = vmatprep.subr.mxu0 0.0
    %327 = vmatpush1.msra.mxu0 %v296
    %328 = vmatprep.subr.mxu0 0.0
    %329 = vmatpush1.msra.mxu0 %v297
    %330 = vmatprep.subr.mxu0 0.0
    %331 = vmatpush1.msra.mxu0 %v298
    %332 = vmatprep.subr.mxu0 0.0
    %333 = vmatpush1.msra.mxu0 %v299
    %334 = vmatprep.subr.mxu0 0.0
    %335 = vmatpush1.msra.mxu0 %v300
    %336 = vmatprep.subr.mxu0 0.0
    %337 = vmatpush1.msra.mxu0 %v301
    %338 = vmatprep.subr.mxu0 0.0
    %339 = vmatpush1.msra.mxu0 %v302
    %340 = vmatprep.subr.mxu0 0.0
    %341 = vmatpush1.msra.mxu0 %v303
    %342 = vmatprep.subr.mxu0 0.0
    %343 = vmatpush1.msra.mxu0 %v304
    %344 = vmatprep.subr.mxu0 0.0
    %345 = vmatpush1.msra.mxu0 0.0
    %346 = vmatprep.subr.mxu0 0.0
    %347 = vmatpush1.msra.mxu0 0.0
    %348 = vmatprep.subr.mxu0 0.0
    %349 = vmatpush1.msra.mxu0 0.0
    %350 = vmatprep.subr.mxu0 0.0
    %351 = vmatpush1.msra.mxu0 0.0
    %352 = vmatprep.subr.mxu0 0.0
    %353 = vmatpush1.msra.mxu0 0.0
    %354 = vmatprep.subr.mxu0 0.0
    %355 = vmatpush1.msra.mxu0 0.0
    %356 = vmatprep.subr.mxu0 0.0
    %357 = vmatpush1.msra.mxu0 0.0
    %358 = vmatprep.subr.mxu0 0.0
    %359 = vmatpush1.msra.mxu0 0.0
    %360 = vmatprep.subr.mxu0 0.0
    %361 = vmatpush1.msra.mxu0 0.0
    %362 = vmatprep.subr.mxu0 0.0
    %363 = vmatpush1.msra.mxu0 0.0
    %364 = vmatprep.subr.mxu0 0.0
    %365 = vmatpush1.msra.mxu0 0.0
    %366 = vmatprep.subr.mxu0 0.0
    %367 = vmatpush1.msra.mxu0 0.0
    %368 = vmatprep.subr.mxu0 0.0
    %369 = vmatpush1.msra.mxu0 0.0
    %370 = vmatprep.subr.mxu0 0.0
    %371 = vmatpush1.msra.mxu0 0.0
    %372 = vmatprep.subr.mxu0 0.0
    %373 = vmatpush1.msra.mxu0 0.0
    %374 = vmatprep.subr.mxu0 0.0
    %375 = vmatpush1.msra.mxu0 0.0
    %376 = vmatprep.mubr.f32.mxu0 0.0
    %377 = vmatmul.mubr.f32.gmra.mrb[0].mxu0 %v288
    %v378 = vpop.f32.mrb[0].mxu0
    %v379 = vadd.f32 %v310, %v378
    %v380 = vpop.f32.mrb[0].mxu0
    %381 = vdwg.mxu0
    %382 = vst [vmem:[#allocation10] sm:$0xff] %v379
    // Predicated region
    $region46: #{tpu_custom_call.1} parent=1 // pred_check
      _
    $region47: #{tpu_custom_call.1} parent=1 // pred_check_branch
      %384 = sbr.rel (0) target = $region49
    $region48: #{tpu_custom_call.1} parent=1 // pred_region
      %s386 = ssub.s32 128, 128
      %387 = vsyncadd [#allocation4], %s386
      %s389 = sshll.u32 [#allocation10], 4
      %s390 = int_to_ptr.vmem [resolvable:$true] %s389
      %392 = dma.vmem_to_hbm [thread:$0]  %s390, 128, %s7, [#allocation4]
    $region49: #{tpu_custom_call.1} parent=1 // pred_fallthru
      _
    // Predicated region
    $region50: #{tpu_custom_call.1} parent=1 // pred_check
      _
    $region51: #{tpu_custom_call.1} parent=1 // pred_check_branch
      %394 = sbr.rel (0) target = $region53
    $region52: #{tpu_custom_call.1} parent=1 // pred_region
      %395 = dma.done [#allocation4], 128
    $region53: #{tpu_custom_call.1} parent=1 // pred_fallthru
      _
    %396 = vsyncpa [#allocation3], 1
    %397 = vsyncpa [#allocation6], 1
    %398 = vsyncpa [#allocation9], 1
    %399 = vsyncpa [#allocation4], 1

</llo_original>
